<compile_context>
chip_gen: v5e
topology: v5e:2x2
jax: 0.10.0
libtpu: 0.0.40
codegen_flags: <defaults>
</compile_context>

<pallas_src>
import functools

import numpy as np

import jax
import jax.numpy as jnp
from jax import lax
from jax.experimental import pallas as pl
from jax.experimental.pallas import tpu as pltpu

_HALO = 128  # lane-aligned halo window; requires filter_sz - 1 <= _HALO


def _round_up(x, m):
    return (x + m - 1) // m * m


# ---------------------------------------------------------------------------
# Kernel bodies
# ---------------------------------------------------------------------------
def _conv_body(xw, w_ref, b_ref, o_ref, *, filter_sz, t_tile, l_off, do_res,
               per_tap, matmul_dtype):
    """xw: (C_in_p, t_tile + _HALO) input window covering this tile + halo."""
    # Shifted taps.  Slices are built once and reused (the residual reuses the
    # l_off slice on the f32 path); the bf16 path casts before any staging so
    # the staged copies are half-width.
    slices = [xw[:, k:k + t_tile] for k in range(filter_sz)]
    if matmul_dtype is not None and xw.dtype != np.dtype(matmul_dtype):
        taps = [s.astype(matmul_dtype) for s in slices]
    else:
        taps = slices

    if per_tap:
        # Small C_in: per-tap accumulating MXU dots, no deep-K staging buffer.
        acc = jnp.dot(w_ref[0], taps[0], preferred_element_type=jnp.float32)
        for k in range(1, filter_sz):
            acc = acc + jnp.dot(w_ref[k], taps[k],
                                preferred_element_type=jnp.float32)
    else:
        # Large C_in: single deep-K im2col matmul.
        rhs = jnp.concatenate(taps, axis=0)               # (F*C_in_p, t_tile)
        acc = jnp.dot(w_ref[...], rhs, preferred_element_type=jnp.float32)

    acc = acc + b_ref[...]                                # bias (f32)
    act = jnp.maximum(acc, 0.0)                           # ReLU (f32)
    if do_res:
        # Residual add of the centrally cropped input, kept in input precision
        # upcast to f32 (needs C_out == C_in; padded channels are zero).
        act = act + slices[l_off].astype(jnp.float32)
    o_ref[0] = act.astype(o_ref.dtype)


def _kernel_window(x_ref, w_ref, b_ref, o_ref, **kw):
    # x_ref: (1, C_in_p, t_tile + _HALO) overlapping window (pl.Element offsets)
    _conv_body(x_ref[0], w_ref, b_ref, o_ref, **kw)


def _kernel_split(x_ref, xh_ref, w_ref, b_ref, o_ref, **kw):
    # Fallback path: halo arrives as a second 128-column block -> concat in VMEM.
    _conv_body(jnp.concatenate([x_ref[0], xh_ref[0]], axis=-1),
               w_ref, b_ref, o_ref, **kw)


# ---------------------------------------------------------------------------
# Tile / VMEM sizing
# ---------------------------------------------------------------------------
def _chip_budgets():
    """(tile budget, vmem_limit_bytes) sized per chip's physical VMEM."""
    cap = None
    try:
        cap = getattr(pltpu.get_tpu_info(), "vmem_capacity_bytes", None)
    except Exception:
        cap = None
    if cap is not None and cap > 64 * 1024 * 1024:
        # v5e / v6e class (128 MiB VMEM): bigger tiles, deeper limit.
        return 40 * 1024 * 1024, 64 * 1024 * 1024
    # v7x class (64 MiB VMEM per TensorCore) or unknown: stay conservative.
    return 20 * 1024 * 1024, 32 * 1024 * 1024


def _vmem_estimate(t_tile, c_in_p, c_out_p, filter_sz, in_bytes, out_bytes,
                   mm_bytes, per_tap):
    win = t_tile + _HALO
    x_win = 2 * c_in_p * win * in_bytes                      # double-buffered input window
    out = 2 * c_out_p * t_tile * out_bytes                   # double-buffered output tile
    w = 2 * c_out_p * max(filter_sz * c_in_p, 128) * mm_bytes
    bias = 2 * c_out_p * 128 * 4
    taps = filter_sz * c_in_p * t_tile * mm_bytes            # shifted-slice temporaries
    rhs = 0 if per_tap else filter_sz * c_in_p * t_tile * mm_bytes
    acc = 2 * c_out_p * t_tile * 4
    return x_win + out + w + bias + taps + rhs + acc


def _pick_time_tile(t_out, batch, c_in_p, c_out_p, filter_sz, in_bytes,
                    out_bytes, mm_bytes, per_tap, budget_bytes):
    t_out_128 = _round_up(t_out, 128)
    max_tiles = t_out_128 // 128
    # Keep both v7x TensorCores busy (and give each >=2 steps of pipeline)
    # even for small batch sizes.
    need_tiles = min(max(1, -(-4 // batch)), max_tiles)
    t_tile = 128
    for cand in (2048, 1024, 512, 256, 128):
        if cand > t_out_128:
            continue
        if -(-t_out_128 // cand) < need_tiles:
            continue
        if _vmem_estimate(cand, c_in_p, c_out_p, filter_sz, in_bytes,
                          out_bytes, mm_bytes, per_tap) > budget_bytes:
            continue
        waste = _round_up(t_out_128, cand) - t_out_128
        if waste * 8 > t_out_128:          # bound dead-column work to ~12.5%
            continue
        t_tile = cand
        break
    return t_tile


# ---------------------------------------------------------------------------
# Wrapper
# ---------------------------------------------------------------------------
def conv_relu_res(x, w, b, *, filter_sz, do_res=True, matmul_dtype="auto"):
    """x: (B, C_in, T), w: (C_out, C_in, F), b: (C_out,) -> (B, C_out, T-F+1)."""
    B, C_in, T = x.shape
    C_out = w.shape[0]
    assert w.shape == (C_out, C_in, filter_sz)
    assert T >= filter_sz, "input shorter than filter"
    assert filter_sz - 1 <= _HALO, "filter too wide for the 128-column halo"
    if do_res and C_out != C_in:
        raise ValueError("residual connection requires n_in_chan == n_out_chan")
    # TODO(synk): stride != 1 (only legal in the module when do_res=False) is not implemented.

    t_out = T - filter_sz + 1
    l_off = (filter_sz - 1) // 2
    out_dtype = x.dtype

    if isinstance(matmul_dtype, str) and matmul_dtype == "auto":
        # bf16 MXU operands (f32 accumulation) once the kernel is MXU-bound;
        # full f32 operands for small channel counts where precision is free.
        matmul_dtype = jnp.bfloat16 if (x.dtype == jnp.float32 and C_in >= 128) else None

    two_byte_mm = matmul_dtype is not None and np.dtype(matmul_dtype).itemsize == 2
    sub = 16 if two_byte_mm else 8                      # bf16 sublane packing
    c_in_p = _round_up(C_in, sub)
    c_out_p = _round_up(C_out, sub)
    per_tap = c_in_p <= 64                              # skip deep-K staging for small C_in

    # When no residual needs the original-precision input, cast once in the
    # wrapper: halves input HBM traffic and the in-kernel tap staging.
    if matmul_dtype is not None and not do_res:
        x = x.astype(matmul_dtype)

    in_bytes = np.dtype(x.dtype).itemsize
    out_bytes = np.dtype(out_dtype).itemsize
    mm_bytes = np.dtype(matmul_dtype).itemsize if matmul_dtype is not None else in_bytes

    budget, vmem_limit = _chip_budgets()
    t_tile = _pick_time_tile(t_out, B, c_in_p, c_out_p, filter_sz, in_bytes,
                             out_bytes, mm_bytes, per_tap, budget)
    t_out_pad = _round_up(_round_up(t_out, 128), t_tile)
    n_t = t_out_pad // t_tile
    t_total = t_out_pad + _HALO

    pad_c = c_in_p - C_in
    pad_t = t_total - T
    x_pad = x if (pad_c == 0 and pad_t == 0) else jnp.pad(
        x, ((0, 0), (0, pad_c), (0, pad_t)))

    w_dtype = matmul_dtype if matmul_dtype is not None else x.dtype
    if per_tap:
        # (F, C_out_p, C_in_p): one MXU matmul per tap, accumulated in f32.
        w2 = jnp.transpose(w, (2, 0, 1)).astype(w_dtype)
        w2 = jnp.pad(w2, ((0, 0), (0, c_out_p - C_out), (0, c_in_p - C_in)))
        w_block = (filter_sz, c_out_p, c_in_p)
    else:
        # im2col layout (C_out_p, F*C_in_p): single deep-K matmul.
        w2 = jnp.transpose(w, (0, 2, 1))                        # (C_out, F, C_in)
        w2 = jnp.pad(w2, ((0, c_out_p - C_out), (0, 0), (0, c_in_p - C_in)))
        w2 = w2.reshape(c_out_p, filter_sz * c_in_p).astype(w_dtype)
        w_block = (c_out_p, filter_sz * c_in_p)

    b2 = jnp.pad(b.astype(jnp.float32), (0, c_out_p - C_out)).reshape(c_out_p, 1)

    static = dict(filter_sz=filter_sz, t_tile=t_tile, l_off=l_off,
                  do_res=do_res, per_tap=per_tap, matmul_dtype=matmul_dtype)
    out_shape = jax.ShapeDtypeStruct((B, c_out_p, t_out_pad), out_dtype)
    out_spec = pl.BlockSpec((1, c_out_p, t_tile), lambda bi, ti: (bi, 0, ti))
    compiler_params = pltpu.CompilerParams(
        dimension_semantics=("parallel", "parallel"),
        vmem_limit_bytes=vmem_limit)

    def _call_optimized():
        win = t_tile + _HALO
        in_specs = [
            # One overlapping input window per time tile (Element offsets on
            # the time axis): no halo concat / second DMA stream in-kernel.
            pl.BlockSpec((1, c_in_p, pl.Element(win)),
                         lambda bi, ti: (bi, 0, ti * t_tile)),
            # Grid-invariant weights / bias: single-buffered.
            pl.BlockSpec(w_block, lambda bi, ti: (0,) * len(w_block),
                         pipeline_mode=pl.Buffered(1)),
            pl.BlockSpec((c_out_p, 1), lambda bi, ti: (0, 0),
                         pipeline_mode=pl.Buffered(1)),
        ]
        return pl.pallas_call(
            functools.partial(_kernel_window, **static),
            out_shape=out_shape,
            grid_spec=pltpu.PrefetchScalarGridSpec(
                num_scalar_prefetch=0, grid=(B, n_t),
                in_specs=in_specs, out_specs=out_spec),
            compiler_params=compiler_params,
        )(x_pad, w2, b2)

    def _call_fallback():
        halo_blocks = t_tile // _HALO
        in_specs = [
            pl.BlockSpec((1, c_in_p, t_tile), lambda bi, ti: (bi, 0, ti)),
            pl.BlockSpec((1, c_in_p, _HALO),
                         lambda bi, ti: (bi, 0, (ti + 1) * halo_blocks)),
            pl.BlockSpec(w_block, lambda bi, ti: (0,) * len(w_block)),
            pl.BlockSpec((c_out_p, 1), lambda bi, ti: (0, 0)),
        ]
        return pl.pallas_call(
            functools.partial(_kernel_split, **static),
            out_shape=out_shape,
            grid_spec=pltpu.PrefetchScalarGridSpec(
                num_scalar_prefetch=0, grid=(B, n_t),
                in_specs=in_specs, out_specs=out_spec),
            compiler_params=compiler_params,
        )(x_pad, x_pad, w2, b2)

    try:
        out = _call_optimized()
    except Exception:
        # API-availability safety net (older Pallas without pl.Element /
        # pl.Buffered pipeline_mode): halo as a second BlockSpec + in-kernel concat.
        out = _call_fallback()

    return out[:, :C_out, :t_out]


# ---------------------------------------------------------------------------
# Pure-JAX reference mirroring the PyTorch forward
# ---------------------------------------------------------------------------
def conv_relu_res_reference(x, w, b, *, filter_sz, do_res=True):
    pre = lax.conv_general_dilated(
        x.astype(jnp.float32), w.astype(jnp.float32),
        window_strides=(1,), padding="VALID",
        dimension_numbers=("NCH", "OIH", "NCH"),
        precision=lax.Precision.HIGHEST,
    ) + b.astype(jnp.float32)[None, :, None]
    act = jnp.maximum(pre, 0.0)
    if do_res:
        l_off = (filter_sz - 1) // 2
        r_off = filter_sz // 2
        act = act + x[:, :, l_off: x.shape[-1] - r_off].astype(jnp.float32)
    return act.astype(x.dtype)


# ---------------------------------------------------------------------------
# Self-test
# ---------------------------------------------------------------------------
if __name__ == "__main__":
    root = jax.random.PRNGKey(0)
    k1, k2, k3 = jax.random.split(root, 3)

    def make_inputs(key, B, C, T, F):
        kx, kw, kb = jax.random.split(key, 3)
        x = jax.random.normal(kx, (B, C, T), dtype=jnp.float32)
        fan = C * F
        limit = (6.0 / (fan + fan)) ** 0.5          # xavier-uniform style init
        w = jax.random.uniform(kw, (C, C, F), minval=-limit, maxval=limit,
                               dtype=jnp.float32)
        b = jax.random.uniform(kb, (C,), minval=-0.1, maxval=0.1,
                               dtype=jnp.float32)
        # Snap x / w to bf16-representable f32 values so the check is exact
        # regardless of the MXU contract precision (f32 or bf16 operands give
        # identical products; accumulation stays f32 on both sides).
        snap = lambda a: a.astype(jnp.bfloat16).astype(jnp.float32)
        return snap(x), snap(w), b

    # 1) Primary small config (module docstring shapes): f32 per-tap path + residual.
    x, w, b = make_inputs(k1, B=2, C=4, T=16, F=3)
    out = jax.block_until_ready(conv_relu_res(x, w, b, filter_sz=3, do_res=True))
    ref = conv_relu_res_reference(x, w, b, filter_sz=3, do_res=True)
    assert out.shape == (2, 4, 14)
    assert jnp.allclose(out, ref, atol=1e-3, rtol=1e-3), "mismatch vs reference (f32 path)"
    # Side statistic kept by the PyTorch module: computed AFTER the in-place
    # residual add, exactly as in the module's forward (attribute, not returned).
    frac_zero_act = jnp.mean((out == 0.0).astype(jnp.float32))  # noqa: F841

    # 2) Even filter size, no residual (pre-cast input path), ragged time tail.
    x2, w2, b2 = make_inputs(k2, B=1, C=8, T=300, F=4)
    out2 = jax.block_until_ready(conv_relu_res(x2, w2, b2, filter_sz=4, do_res=False))
    ref2 = conv_relu_res_reference(x2, w2, b2, filter_sz=4, do_res=False)
    assert out2.shape == (1, 8, 297)
    assert jnp.allclose(out2, ref2, atol=1e-3, rtol=1e-3), "mismatch vs reference (no-res path)"

    # 3) Larger channel count: exercises the deep-K im2col path and the
    #    auto bf16 MXU-operand path (f32 accumulation, f32 residual).
    x3, w3, b3 = make_inputs(k3, B=2, C=128, T=512, F=3)
    out3 = jax.block_until_ready(conv_relu_res(x3, w3, b3, filter_sz=3, do_res=True))
    ref3 = conv_relu_res_reference(x3, w3, b3, filter_sz=3, do_res=True)
    assert out3.shape == (2, 128, 510)
    assert jnp.allclose(out3, ref3, atol=2e-3, rtol=2e-3), "mismatch vs reference (bf16/deep-K path)"

    print("KERNEL_OK")
</pallas_src>

<mosaic_0001>
module attributes {stable_mosaic.version = 11 : i64} {
  func.func @_kernel_split(%arg0: i32, %arg1: i32, %arg2: memref<1x8x128xf32, #tpu.memory_space<vmem>>, %arg3: memref<1x8x128xf32, #tpu.memory_space<vmem>>, %arg4: memref<3x8x8xf32, #tpu.memory_space<vmem>>, %arg5: memref<8x1xf32, #tpu.memory_space<vmem>>, %arg6: memref<1x8x128xf32, #tpu.memory_space<vmem>>) attributes {dimension_semantics = [#tpu.dimension_semantics<parallel>, #tpu.dimension_semantics<parallel>], iteration_bounds = array<i64: 2, 1>, scalar_prefetch = 0 : i64, scratch_operands = 0 : i64, tpu.core_type = #tpu.core_type<tc>, window_params = [{transform_indices = @transform_0, window_bounds = array<i64: 1, 8, 128>}, {transform_indices = @transform_1, window_bounds = array<i64: 1, 8, 128>}, {pipeline_mode = #tpu.pipeline_mode<synchronous>, transform_indices = @transform_2, window_bounds = array<i64: 3, 8, 8>}, {pipeline_mode = #tpu.pipeline_mode<synchronous>, transform_indices = @transform_3, window_bounds = array<i64: 8, 1>}, {transform_indices = @transform_4, window_bounds = array<i64: 1, 8, 128>}]} {
    %c0 = arith.constant 0 : index
    %c0_0 = arith.constant 0 : index
    %c0_1 = arith.constant 0 : index
    %0 = vector.load %arg2[%c0, %c0_0, %c0_1] : memref<1x8x128xf32, #tpu.memory_space<vmem>>, vector<1x8x128xf32>
    %1 = vector.shape_cast %0 : vector<1x8x128xf32> to vector<8x128xf32>
    %c0_2 = arith.constant 0 : index
    %c0_3 = arith.constant 0 : index
    %c0_4 = arith.constant 0 : index
    %2 = vector.load %arg3[%c0_2, %c0_3, %c0_4] : memref<1x8x128xf32, #tpu.memory_space<vmem>>, vector<1x8x128xf32>
    %3 = vector.shape_cast %2 : vector<1x8x128xf32> to vector<8x128xf32>
    %4 = tpu.concatenate %1, %3 in 1 : vector<8x128xf32>, vector<8x128xf32> -> vector<8x256xf32>
    %5 = vector.extract_strided_slice %4 {offsets = [0, 0], sizes = [8, 128], strides = [1, 1]} : vector<8x256xf32> to vector<8x128xf32>
    %6 = vector.extract_strided_slice %4 {offsets = [0, 1], sizes = [8, 128], strides = [1, 1]} : vector<8x256xf32> to vector<8x128xf32>
    %7 = vector.extract_strided_slice %4 {offsets = [0, 2], sizes = [8, 128], strides = [1, 1]} : vector<8x256xf32> to vector<8x128xf32>
    %c0_5 = arith.constant 0 : index
    %c0_6 = arith.constant 0 : index
    %c0_7 = arith.constant 0 : index
    %8 = vector.load %arg4[%c0_5, %c0_6, %c0_7] : memref<3x8x8xf32, #tpu.memory_space<vmem>>, vector<1x8x8xf32>
    %9 = vector.shape_cast %8 : vector<1x8x8xf32> to vector<8x8xf32>
    %cst = arith.constant dense<0.000000e+00> : vector<8x128xf32>
    %10 = tpu.matmul %9, %5, %cst {dimension_numbers = #tpu.dot_dimension_numbers<[1], [0], [0], [1], [0, 0, 1, 1], [], []>} : vector<8x8xf32>, vector<8x128xf32>, vector<8x128xf32> -> vector<8x128xf32>
    %c1 = arith.constant 1 : index
    %c0_8 = arith.constant 0 : index
    %c0_9 = arith.constant 0 : index
    %11 = vector.load %arg4[%c1, %c0_8, %c0_9] : memref<3x8x8xf32, #tpu.memory_space<vmem>>, vector<1x8x8xf32>
    %12 = vector.shape_cast %11 : vector<1x8x8xf32> to vector<8x8xf32>
    %cst_10 = arith.constant dense<0.000000e+00> : vector<8x128xf32>
    %13 = tpu.matmul %12, %6, %cst_10 {dimension_numbers = #tpu.dot_dimension_numbers<[1], [0], [0], [1], [0, 0, 1, 1], [], []>} : vector<8x8xf32>, vector<8x128xf32>, vector<8x128xf32> -> vector<8x128xf32>
    %14 = arith.addf %10, %13 : vector<8x128xf32>
    %c2 = arith.constant 2 : index
    %c0_11 = arith.constant 0 : index
    %c0_12 = arith.constant 0 : index
    %15 = vector.load %arg4[%c2, %c0_11, %c0_12] : memref<3x8x8xf32, #tpu.memory_space<vmem>>, vector<1x8x8xf32>
    %16 = vector.shape_cast %15 : vector<1x8x8xf32> to vector<8x8xf32>
    %cst_13 = arith.constant dense<0.000000e+00> : vector<8x128xf32>
    %17 = tpu.matmul %16, %7, %cst_13 {dimension_numbers = #tpu.dot_dimension_numbers<[1], [0], [0], [1], [0, 0, 1, 1], [], []>} : vector<8x8xf32>, vector<8x128xf32>, vector<8x128xf32> -> vector<8x128xf32>
    %18 = arith.addf %14, %17 : vector<8x128xf32>
    %c0_14 = arith.constant 0 : index
    %c0_15 = arith.constant 0 : index
    %19 = vector.load %arg5[%c0_14, %c0_15] : memref<8x1xf32, #tpu.memory_space<vmem>>, vector<8x1xf32>
    %20 = vector.broadcast %19 : vector<8x1xf32> to vector<8x128xf32>
    %21 = arith.addf %18, %20 : vector<8x128xf32>
    %cst_16 = arith.constant 0.000000e+00 : f32
    %22 = vector.broadcast %cst_16 : f32 to vector<8x128xf32>
    %23 = arith.maximumf %21, %22 : vector<8x128xf32>
    %24 = arith.addf %23, %6 : vector<8x128xf32>
    %c0_17 = arith.constant 0 : index
    %c0_18 = arith.constant 0 : index
    %c0_19 = arith.constant 0 : index
    %25 = vector.load %arg6[%c0_17, %c0_18, %c0_19] : memref<1x8x128xf32, #tpu.memory_space<vmem>>, vector<1x8x128xf32>
    %26 = vector.shape_cast %25 : vector<1x8x128xf32> to vector<8x128xf32>
    %27 = vector.shape_cast %24 : vector<8x128xf32> to vector<1x8x128xf32>
    tpu.vector_store %arg6[%c0_17, %c0_18, %c0_19], %27 {strides = array<i32>} : memref<1x8x128xf32, #tpu.memory_space<vmem>>, vector<1x8x128xf32>,
    return
  }
  func.func @transform_0(%arg0: i32, %arg1: i32) -> (i32, i32, i32) {
    %c0_i32 = arith.constant 0 : i32
    %c0_i32_0 = arith.constant 0 : i32
    return %arg0, %c0_i32, %arg1 : i32, i32, i32
  }
  func.func @transform_1(%arg0: i32, %arg1: i32) -> (i32, i32, i32) {
    %c1_i32 = arith.constant 1 : i32
    %0 = arith.addi %arg1, %c1_i32 : i32
    %c1_i32_0 = arith.constant 1 : i32
    %1 = arith.muli %0, %c1_i32_0 : i32
    %c0_i32 = arith.constant 0 : i32
    %c0_i32_1 = arith.constant 0 : i32
    return %arg0, %c0_i32, %1 : i32, i32, i32
  }
  func.func @transform_2(%arg0: i32, %arg1: i32) -> (i32, i32, i32) {
    %c0_i32 = arith.constant 0 : i32
    %c0_i32_0 = arith.constant 0 : i32
    %c0_i32_1 = arith.constant 0 : i32
    %c0_i32_2 = arith.constant 0 : i32
    return %c0_i32, %c0_i32_0, %c0_i32_1 : i32, i32, i32
  }
  func.func @transform_3(%arg0: i32, %arg1: i32) -> (i32, i32) {
    %c0_i32 = arith.constant 0 : i32
    %c0_i32_0 = arith.constant 0 : i32
    %c0_i32_1 = arith.constant 0 : i32
    return %c0_i32, %c0_i32_0 : i32, i32
  }
  func.func @transform_4(%arg0: i32, %arg1: i32) -> (i32, i32, i32) {
    %c0_i32 = arith.constant 0 : i32
    %c0_i32_0 = arith.constant 0 : i32
    return %arg0, %c0_i32, %arg1 : i32, i32, i32
  }
}

</mosaic_0001>

<llo_original>
// kernel: tpu_custom_call.1
$region0: #{tpu_custom_call.1}
  #allocation0 [shape = 'u32[]', space=smem, size = 0x4, offset = 0x4, fixed_abs, tag = 'smem constant byte address 0x4 - core index']
  #allocation1 [shape = 'u32[72,128]{1,0:T(1,128)}', space=vmem, size = 0x9000, scoped, tag = 'internal scratch']
  %s0 = inlined_call_operand.hbm [shape: f32[2,8,256], index: 0, kind: input, shape index: {}]
  %s1 = inlined_call_operand.hbm [shape: f32[2,8,256], index: 1, kind: input, shape index: {}]
  %s2 = inlined_call_operand.hbm [shape: f32[3,8,8], index: 2, kind: input, shape index: {}]
  %s3 = inlined_call_operand.vmem [shape: f32[8,1], index: 3, kind: input, shape index: {}]
  %s4 = inlined_call_operand.hbm [shape: f32[2,8,128], index: 4, kind: output, shape index: {}]
  %s5 = sld [smem:[#allocation0]]
  $region61: #{tpu_custom_call.1} parent=0
    _
  %s7 = ssub.s32 1, %s5
  %s8 = scalar_select 0, %s7, %s5
  $region1: #{tpu_custom_call.1} parent=0
    #allocation2 [shape = 'u8[8192]{0}', space=vmem, size = 0x2000, scoped, tag = 'input window, operand 0']
    #allocation3 [shape = 's32[2]{0}', space=sflag, size = 0x8, scoped, tag = 'scoped memory for tpu_custom_call.1']
    #allocation4 [shape = 's32[2]{0}', space=sflag, size = 0x8, scoped, tag = 'scoped memory for tpu_custom_call.1']
    #allocation5 [shape = 'u8[8192]{0}', space=vmem, size = 0x2000, scoped, tag = 'input window, operand 1']
    #allocation6 [shape = 's32[2]{0}', space=sflag, size = 0x8, scoped, tag = 'scoped memory for tpu_custom_call.1']
    #allocation7 [shape = 'u8[12288]{0}', space=vmem, size = 0x3000, scoped, tag = 'input window, operand 2, single buffered']
    #allocation8 [shape = 'u8[8192]{0}', space=vmem, size = 0x2000, scoped, tag = 'output window, operand 0']
    %9 = vsyncpa [#allocation3], 0
    %s10 = scalar_lea.sflag [#allocation3], 1
    %11 = vsyncpa %s10, 0
    %12 = vsyncpa [#allocation6], 0
    %s13 = scalar_lea.sflag [#allocation6], 1
    %14 = vsyncpa %s13, 0
    %15 = vsyncpa [#allocation4], 0
    %s16 = scalar_lea.sflag [#allocation4], 1
    %17 = vsyncpa %s16, 0
    loop: start=0, step=1, limit=4
    $region2: #{tpu_custom_call.1} parent=1 // loop_pre_header
      _
    $region3: #{tpu_custom_call.1} parent=1 // loop_header
      %s19 = sphi 0, %s23
      %p20 = scmp.ge.s32.totalorder %s19, 4
      %s26 = sphi 0, %s38
      %s27 = sphi 0, %s34
      %s28 = sphi 0, %s26
      %s29 = sphi 0, %s27
      %s30 = sphi 0, %s28
      %s31 = sphi 0, %s29
      %s43 = sphi 0, %s45
      %s46 = sphi 0, %s43
      %s47 = sphi 0, %s46
      %s63 = sphi 0, %s47
      %s73 = sphi 0, %s75
      %s76 = sphi 0, %s73
      %s77 = sphi 0, %s76
      %s93 = sphi 0, %s77
      %s97 = sphi 0, %s97
      %s99 = sphi 0, %s97
      %s100 = sphi 0, %s99
      %s114 = sphi 0, %s100
      %s118 = sphi 0, %s118
      %s120 = sphi 0, %s118
      %s121 = sphi 0, %s120
      %s135 = sphi 0, %s121
      %s143 = sphi 0, %s145
      %s146 = sphi 0, %s143
      %s147 = sphi 0, %s146
      %s163 = sphi 0, %s147
    $region4: #{tpu_custom_call.1} parent=1 // loop_header_branch
      %22 = sbr.rel (%p20) target = $region8
    $region5: #{tpu_custom_call.1} parent=1 // loop_body
      %s24 = ssub.s32 %s19, 1
      %s25 = ssub.s32 %s19, 2
      %s32 = sadd.s32 1, %s27
      %p33 = scmp.ge.s32.totalorder %s32, 1
      %s34 = scalar_select %p33, 0, %s32
      %s35 = sadd.s32 1, %s26
      %s36 = scalar_select %p33, %s35, %s26
      %p37 = scmp.ge.s32.totalorder %s36, 2
      %s38 = scalar_select %p37, 0, %s36
      %s39 = ssub.s32 %s26, %s38
      %s40 = ssub.s32 %s27, %s34
      %s41 = sor.u32 %s39, %s40
      %p42 = scmp.eq.s32.totalorder %s41, 0
      %s44 = sadd.s32 %s43, 1
      %s45 = scalar_select %p42, %s43, %s44
      %p48 = pneg %p42
      %p49 = scmp.eq.s32.totalorder %s19, 1
      %p50 = por %p48, %p49
      %p51 = scmp.ne.s32.totalorder %s43, %s46
      %p52 = scmp.eq.s32.totalorder %s19, 0
      %p53 = por %p51, %p52
      %p54 = scmp.ne.s32.totalorder %s43, %s46
      %p55 = scmp.eq.s32.totalorder %s24, 1
      %p56 = por %p54, %p55
      %p57 = scmp.ne.s32.totalorder %s46, %s47
      %p58 = scmp.eq.s32.totalorder %s24, 0
      %p59 = por %p57, %p58
      %p60 = scmp.ne.s32.totalorder %s46, %s47
      %p61 = scmp.eq.s32.totalorder %s25, 1
      %p62 = por %p60, %p61
      %p64 = scmp.ne.s32.totalorder %s47, %s63
      %p65 = scmp.eq.s32.totalorder %s25, 0
      %p66 = por %p64, %p65
      %s67 = sadd.s32 %s27, 1
      %s68 = sadd.s32 %s34, 1
      %s69 = ssub.s32 %s26, %s38
      %s70 = ssub.s32 %s67, %s68
      %s71 = sor.u32 %s69, %s70
      %p72 = scmp.eq.s32.totalorder %s71, 0
      %s74 = sadd.s32 %s73, 1
      %s75 = scalar_select %p72, %s73, %s74
      %p78 = pneg %p72
      %p79 = scmp.eq.s32.totalorder %s19, 1
      %p80 = por %p78, %p79
      %p81 = scmp.ne.s32.totalorder %s73, %s76
      %p82 = scmp.eq.s32.totalorder %s19, 0
      %p83 = por %p81, %p82
      %p84 = scmp.ne.s32.totalorder %s73, %s76
      %p85 = scmp.eq.s32.totalorder %s24, 1
      %p86 = por %p84, %p85
      %p87 = scmp.ne.s32.totalorder %s76, %s77
      %p88 = scmp.eq.s32.totalorder %s24, 0
      %p89 = por %p87, %p88
      %p90 = scmp.ne.s32.totalorder %s76, %s77
      %p91 = scmp.eq.s32.totalorder %s25, 1
      %p92 = por %p90, %p91
      %p94 = scmp.ne.s32.totalorder %s77, %s93
      %p95 = scmp.eq.s32.totalorder %s25, 0
      %p96 = por %p94, %p95
      %s98 = sadd.s32 %s97, 1
      %p101 = scmp.eq.s32.totalorder %s19, 1
      %p102 = scmp.ne.s32.totalorder %s97, %s99
      %p103 = scmp.eq.s32.totalorder %s19, 0
      %p104 = por %p102, %p103
      %p105 = scmp.ne.s32.totalorder %s97, %s99
      %p106 = scmp.eq.s32.totalorder %s24, 1
      %p107 = por %p105, %p106
      %p108 = scmp.ne.s32.totalorder %s99, %s100
      %p109 = scmp.eq.s32.totalorder %s24, 0
      %p110 = por %p108, %p109
      %p111 = scmp.ne.s32.totalorder %s99, %s100
      %p112 = scmp.eq.s32.totalorder %s25, 1
      %p113 = por %p111, %p112
      %p115 = scmp.ne.s32.totalorder %s100, %s114
      %p116 = scmp.eq.s32.totalorder %s25, 0
      %p117 = por %p115, %p116
      %s119 = sadd.s32 %s118, 1
      %p122 = scmp.eq.s32.totalorder %s19, 1
      %p123 = scmp.ne.s32.totalorder %s118, %s120
      %p124 = scmp.eq.s32.totalorder %s19, 0
      %p125 = por %p123, %p124
      %p126 = scmp.ne.s32.totalorder %s118, %s120
      %p127 = scmp.eq.s32.totalorder %s24, 1
      %p128 = por %p126, %p127
      %p129 = scmp.ne.s32.totalorder %s120, %s121
      %p130 = scmp.eq.s32.totalorder %s24, 0
      %p131 = por %p129, %p130
      %p132 = scmp.ne.s32.totalorder %s120, %s121
      %p133 = scmp.eq.s32.totalorder %s25, 1
      %p134 = por %p132, %p133
      %p136 = scmp.ne.s32.totalorder %s121, %s135
      %p137 = scmp.eq.s32.totalorder %s25, 0
      %p138 = por %p136, %p137
      %s139 = ssub.s32 %s26, %s38
      %s140 = ssub.s32 %s27, %s34
      %s141 = sor.u32 %s139, %s140
      %p142 = scmp.eq.s32.totalorder %s141, 0
      %s144 = sadd.s32 %s143, 1
      %s145 = scalar_select %p142, %s143, %s144
      %p148 = pneg %p142
      %p149 = scmp.eq.s32.totalorder %s19, 1
      %p150 = por %p148, %p149
      %p151 = scmp.ne.s32.totalorder %s143, %s146
      %p152 = scmp.eq.s32.totalorder %s19, 0
      %p153 = por %p151, %p152
      %p154 = scmp.ne.s32.totalorder %s143, %s146
      %p155 = scmp.eq.s32.totalorder %s24, 1
      %p156 = por %p154, %p155
      %p157 = scmp.ne.s32.totalorder %s146, %s147
      %p158 = scmp.eq.s32.totalorder %s24, 0
      %p159 = por %p157, %p158
      %p160 = scmp.ne.s32.totalorder %s146, %s147
      %p161 = scmp.eq.s32.totalorder %s25, 1
      %p162 = por %p160, %p161
      %p164 = scmp.ne.s32.totalorder %s147, %s163
      %p165 = scmp.eq.s32.totalorder %s25, 0
      %p166 = por %p164, %p165
      %p167 = scmp.le.s32.totalorder 1, %s19
      %p168 = scmp.lt.s32.totalorder %s19, 3
      %p169 = pnand %p167, %p168
      %p170 = pneg %p169
      // Predicated region
      $region9: #{tpu_custom_call.1} parent=5 // pred_check
        _
      $region10: #{tpu_custom_call.1} parent=5 // pred_check_branch
        %172 = sbr.rel (%p169) target = $region12
      $region11: #{tpu_custom_call.1} parent=5 // pred_region
        %s173 = ssub.s32 %s19, 1
        // Predicated region
        $region13: #{tpu_custom_call.1} parent=11 // pred_check
          %p174 = pneg %p110
        $region14: #{tpu_custom_call.1} parent=11 // pred_check_branch
          %176 = sbr.rel (%p174) target = $region16
        $region15: #{tpu_custom_call.1} parent=11 // pred_region
          %178 = vsyncadd [#allocation6], 0
          %s179 = sshll.u32 %s2, 4
          %s180 = int_to_ptr.hbm [resolvable:$true] %s179
          %s181 = sshll.u32 [#allocation7], 4
          %s182 = int_to_ptr.vmem [resolvable:$true] %s181
          %187 = dma.hbm_to_vmem [thread:$0]  %s180, 384, %s182, [#allocation6], 128, 128, 8
        $region16: #{tpu_custom_call.1} parent=11 // pred_fallthru
          _
        // Predicated region
        $region17: #{tpu_custom_call.1} parent=11 // pred_check
          %p188 = pneg %p131
        $region18: #{tpu_custom_call.1} parent=11 // pred_check_branch
          %190 = sbr.rel (%p188) target = $region20
        $region19: #{tpu_custom_call.1} parent=11 // pred_region
          _
        $region20: #{tpu_custom_call.1} parent=11 // pred_fallthru
          _
      $region12: #{tpu_custom_call.1} parent=5 // pred_fallthru
        _
      %p191 = scmp.lt.s32.totalorder %s19, 2
      // Predicated region
      $region21: #{tpu_custom_call.1} parent=5 // pred_check
        %p192 = pneg %p191
      $region22: #{tpu_custom_call.1} parent=5 // pred_check_branch
        %194 = sbr.rel (%p192) target = $region24
      $region23: #{tpu_custom_call.1} parent=5 // pred_region
        // Predicated region
        $region25: #{tpu_custom_call.1} parent=23 // pred_check
          %p195 = pneg %p53
        $region26: #{tpu_custom_call.1} parent=23 // pred_check_branch
          %197 = sbr.rel (%p195) target = $region28
        $region27: #{tpu_custom_call.1} parent=23 // pred_region
          %s198 = sand.u32 %s43, 1
          %s199 = scalar_lea.sflag [#allocation3], %s198
          %s200 = sand.u32 %s43, 1
          %s201 = smul.addr %s200, 8
          %s202 = scalar_lea.vmem [#allocation2], %s201
          %204 = vsyncadd %s199, 0
          %s205 = smul.addr %s26, 2
          %s206 = sadd.s32 %s27, %s205
          %s207 = smul.addr %s206, 8
          %s208 = scalar_lea.hbm %s0, %s207
          %s210 = sshll.u32 %s208, 4
          %s211 = int_to_ptr.hbm [resolvable:$true] %s210
          %s212 = sshll.u32 %s202, 4
          %s213 = int_to_ptr.vmem [resolvable:$true] %s212
          %215 = dma.hbm_to_vmem [thread:$0]  %s211, 128, %s213, %s199
        $region28: #{tpu_custom_call.1} parent=23 // pred_fallthru
          _
        // Predicated region
        $region29: #{tpu_custom_call.1} parent=23 // pred_check
          %p216 = pneg %p83
        $region30: #{tpu_custom_call.1} parent=23 // pred_check_branch
          %218 = sbr.rel (%p216) target = $region32
        $region31: #{tpu_custom_call.1} parent=23 // pred_region
          %s219 = sand.u32 %s19, 1
          %s220 = scalar_lea.sflag [#allocation6], %s219
          %s221 = sand.u32 %s73, 1
          %s222 = smul.addr %s221, 8
          %s223 = scalar_lea.vmem [#allocation5], %s222
          %s224 = sadd.s32 %s27, 1
          %226 = vsyncadd %s220, 0
          %s227 = smul.addr %s26, 2
          %s228 = sadd.s32 %s224, %s227
          %s229 = smul.addr %s228, 8
          %s230 = scalar_lea.hbm %s1, %s229
          %s232 = sshll.u32 %s230, 4
          %s233 = int_to_ptr.hbm [resolvable:$true] %s232
          %s234 = sshll.u32 %s223, 4
          %s235 = int_to_ptr.vmem [resolvable:$true] %s234
          %237 = dma.hbm_to_vmem [thread:$0]  %s233, 128, %s235, %s220
        $region32: #{tpu_custom_call.1} parent=23 // pred_fallthru
          _
      $region24: #{tpu_custom_call.1} parent=5 // pred_fallthru
        _
      %p238 = scmp.le.s32.totalorder 1, %s19
      %p239 = scmp.lt.s32.totalorder %s19, 3
      %p240 = pnand %p238, %p239
      %p241 = pneg %p240
      // Predicated region
      $region33: #{tpu_custom_call.1} parent=5 // pred_check
        _
      $region34: #{tpu_custom_call.1} parent=5 // pred_check_branch
        %243 = sbr.rel (%p240) target = $region36
      $region35: #{tpu_custom_call.1} parent=5 // pred_region
        %s244 = ssub.s32 %s19, 1
        %s245 = sand.u32 %s46, 1
        %s246 = scalar_lea.sflag [#allocation3], %s245
        %s247 = sand.u32 %s46, 1
        %s248 = smul.addr %s247, 8
        %s249 = scalar_lea.vmem [#allocation2], %s248
        // Predicated region
        $region37: #{tpu_custom_call.1} parent=35 // pred_check
          %p250 = pneg %p59
        $region38: #{tpu_custom_call.1} parent=35 // pred_check_branch
          %252 = sbr.rel (%p250) target = $region40
        $region39: #{tpu_custom_call.1} parent=35 // pred_region
          %254 = dma.done %s246, 128
        $region40: #{tpu_custom_call.1} parent=35 // pred_fallthru
          _
        %s255 = sand.u32 %s24, 1
        %s256 = scalar_lea.sflag [#allocation6], %s255
        %s257 = sand.u32 %s76, 1
        %s258 = smul.addr %s257, 8
        %s259 = scalar_lea.vmem [#allocation5], %s258
        // Predicated region
        $region41: #{tpu_custom_call.1} parent=35 // pred_check
          %p260 = pneg %p89
        $region42: #{tpu_custom_call.1} parent=35 // pred_check_branch
          %262 = sbr.rel (%p260) target = $region44
        $region43: #{tpu_custom_call.1} parent=35 // pred_region
          %264 = dma.done %s256, 128
        $region44: #{tpu_custom_call.1} parent=35 // pred_fallthru
          _
        // Predicated region
        $region45: #{tpu_custom_call.1} parent=35 // pred_check
          %p265 = pneg %p110
        $region46: #{tpu_custom_call.1} parent=35 // pred_check_branch
          %267 = sbr.rel (%p265) target = $region48
        $region47: #{tpu_custom_call.1} parent=35 // pred_region
          %269 = dma.done [#allocation6], 384
        $region48: #{tpu_custom_call.1} parent=35 // pred_fallthru
          _
        %s270 = sand.u32 %s46, 1
        %s271 = scalar_lea.sflag [#allocation3], %s270
        %s272 = sand.u32 %s46, 1
        %s273 = smul.addr %s272, 8
        %s274 = scalar_lea.vmem [#allocation2], %s273
        %p275 = pneg %p59
        %p276 = pneg %p56
        %s277 = sand.u32 %s24, 1
        %s278 = scalar_lea.sflag [#allocation6], %s277
        %s279 = sand.u32 %s76, 1
        %s280 = smul.addr %s279, 8
        %s281 = scalar_lea.vmem [#allocation5], %s280
        %p282 = pneg %p89
        %p283 = pneg %p86
        %p284 = pneg %p110
        %p285 = pneg %p107
        %p286 = pneg %p131
        %p287 = pneg %p128
        %p288 = pneg %p159
        %p289 = pneg %p156
        %s290 = sand.u32 %s146, 1
        %s291 = scalar_lea.sflag [#allocation4], %s290
        %s292 = sand.u32 %s146, 1
        %s293 = smul.addr %s292, 8
        %s294 = scalar_lea.vmem [#allocation8], %s293
        %s295 = sadd.s32 %s29, 1
        %v296 = vld [vmem:[%s249] sm:$0xff]
        %v297 = vld [vmem:[%s259] sm:$0xff]
        %v298 = vld [vmem:[#allocation7] sm:$0xff]
        %s299 = scalar_lea.vmem [#allocation7], 8
        %v300 = vld [vmem:[%s299] sm:$0xff]
        %303 = vrot.lane.b32.xlu0 %v296, 127
        %v304 = vpop.permute.xlu0 %303
        %305 = vrot.lane.b32.xlu0 %v297, 127
        %v306 = vpop.permute.xlu0 %305
        %vm307 = vcmask 1039360
        %v308 = vsel %vm307, %v304, %v306
        %vm310 = vcmask 64512
        %v312 = vsel %vm310, %v300, 0
        %314 = vmatpush.msra.mxu0 0.0
        %315 = vmatpush.msra.mxu0 0.0
        %316 = vmatpush.msra.mxu0 0.0
        %317 = vmatpush.msra.mxu0 0.0
        %318 = vmatpush.msra.mxu0 0.0
        %319 = vmatpush.msra.mxu0 0.0
        %320 = vmatpush.msra.mxu0 0.0
        %321 = vmatpush.msra.mxu0 0.0
        %322 = vmatpush.msra.mxu0 0.0
        %323 = vmatpush.msra.mxu0 0.0
        %324 = vmatpush.msra.mxu0 0.0
        %325 = vmatpush.msra.mxu0 0.0
        %326 = vmatpush.msra.mxu0 0.0
        %327 = vmatpush.msra.mxu0 0.0
        %328 = vmatpush.msra.mxu0 0.0
        %329 = vmatpush.msra.mxu0 %v308
        %330 = vmatmul.f32.gmra.mxu0 %v312
        %v331 = vpop.f32.mrf.mxu0
        %v332 = vadd.f32 0.0, %v331
        %333 = vdwg.mxu0
        %v335 = vsel %vm310, %v298, 0
        %337 = vmatpush.msra.mxu0 0.0
        %338 = vmatpush.msra.mxu0 0.0
        %339 = vmatpush.msra.mxu0 0.0
        %340 = vmatpush.msra.mxu0 0.0
        %341 = vmatpush.msra.mxu0 0.0
        %342 = vmatpush.msra.mxu0 0.0
        %343 = vmatpush.msra.mxu0 0.0
        %344 = vmatpush.msra.mxu0 0.0
        %345 = vmatpush.msra.mxu0 0.0
        %346 = vmatpush.msra.mxu0 0.0
        %347 = vmatpush.msra.mxu0 0.0
        %348 = vmatpush.msra.mxu0 0.0
        %349 = vmatpush.msra.mxu0 0.0
        %350 = vmatpush.msra.mxu0 0.0
        %351 = vmatpush.msra.mxu0 0.0
        %352 = vmatpush.msra.mxu0 %v296
        %353 = vmatmul.f32.gmra.mxu0 %v335
        %v354 = vpop.f32.mrf.mxu0
        %v355 = vadd.f32 %v332, %v354
        %356 = vdwg.mxu0
        %s357 = scalar_lea.vmem [#allocation7], 16
        %v358 = vld [vmem:[%s357] sm:$0xff]
        %359 = vrot.lane.b32.xlu0 %v296, 126
        %v360 = vpop.permute.xlu0 %359
        %361 = vrot.lane.b32.xlu0 %v297, 126
        %v362 = vpop.permute.xlu0 %361
        %vm363 = vcmask 1031168
        %v364 = vsel %vm363, %v360, %v362
        %v367 = vsel %vm310, %v358, 0
        %369 = vmatpush.msra.mxu0 0.0
        %370 = vmatpush.msra.mxu0 0.0
        %371 = vmatpush.msra.mxu0 0.0
        %372 = vmatpush.msra.mxu0 0.0
        %373 = vmatpush.msra.mxu0 0.0
        %374 = vmatpush.msra.mxu0 0.0
        %375 = vmatpush.msra.mxu0 0.0
        %376 = vmatpush.msra.mxu0 0.0
        %377 = vmatpush.msra.mxu0 0.0
        %378 = vmatpush.msra.mxu0 0.0
        %379 = vmatpush.msra.mxu0 0.0
        %380 = vmatpush.msra.mxu0 0.0
        %381 = vmatpush.msra.mxu0 0.0
        %382 = vmatpush.msra.mxu0 0.0
        %383 = vmatpush.msra.mxu0 0.0
        %384 = vmatpush.msra.mxu0 %v364
        %385 = vmatmul.f32.gmra.mxu0 %v367
        %v386 = vpop.f32.mrf.mxu0
        %v387 = vadd.f32 0.0, %v386
        %388 = vdwg.mxu0
        %v389 = vadd.f32 %v355, %v387
        %v390 = vld [vmem:[%s3] sm:$0xff]
        %392 = vset.pattern.permute.xlu0 0
        %393 = vperm.xlu0 %392, %v390
        %v394 = vpop.permute.xlu0 %393
        %v396 = vadd.f32 %v389, %v394
        %v397 = vmax.f32 %v396, 0.0
        %v398 = vadd.f32 %v397, %v308
        %399 = vst [vmem:[%s294] sm:$0xff] %v398
        %s400 = sand.u32 %s146, 1
        %s401 = scalar_lea.sflag [#allocation4], %s400
        %s402 = sand.u32 %s146, 1
        %s403 = smul.addr %s402, 8
        %s404 = scalar_lea.vmem [#allocation8], %s403
        // Predicated region
        $region49: #{tpu_custom_call.1} parent=35 // pred_check
          %p405 = pneg %p156
        $region50: #{tpu_custom_call.1} parent=35 // pred_check_branch
          %407 = sbr.rel (%p405) target = $region52
        $region51: #{tpu_custom_call.1} parent=35 // pred_region
          %409 = vsyncadd %s401, 0
          %s410 = sadd.s32 %s29, %s28
          %s411 = smul.addr %s410, 8
          %s412 = scalar_lea.hbm %s4, %s411
          %s414 = sshll.u32 %s404, 4
          %s415 = int_to_ptr.vmem [resolvable:$true] %s414
          %s416 = sshll.u32 %s412, 4
          %s417 = int_to_ptr.hbm [resolvable:$true] %s416
          %419 = dma.vmem_to_hbm [thread:$0]  %s415, 128, %s417, %s401
        $region52: #{tpu_custom_call.1} parent=35 // pred_fallthru
          _
      $region36: #{tpu_custom_call.1} parent=5 // pred_fallthru
        _
      %p420 = scmp.le.s32.totalorder 2, %s19
      // Predicated region
      $region53: #{tpu_custom_call.1} parent=5 // pred_check
        %p421 = pneg %p420
      $region54: #{tpu_custom_call.1} parent=5 // pred_check_branch
        %423 = sbr.rel (%p421) target = $region56
      $region55: #{tpu_custom_call.1} parent=5 // pred_region
        %s424 = ssub.s32 %s19, 2
        // Predicated region
        $region57: #{tpu_custom_call.1} parent=55 // pred_check
          %p425 = pneg %p162
        $region58: #{tpu_custom_call.1} parent=55 // pred_check_branch
          %427 = sbr.rel (%p425) target = $region60
        $region59: #{tpu_custom_call.1} parent=55 // pred_region
          %s428 = sand.u32 %s147, 1
          %s429 = scalar_lea.sflag [#allocation4], %s428
          %s430 = sand.u32 %s147, 1
          %s431 = smul.addr %s430, 8
          %s432 = scalar_lea.vmem [#allocation8], %s431
          %434 = dma.done %s429, 128
        $region60: #{tpu_custom_call.1} parent=55 // pred_fallthru
          _
      $region56: #{tpu_custom_call.1} parent=5 // pred_fallthru
        _
    $region6: #{tpu_custom_call.1} parent=1 // loop_footer
      %s23 = sadd.s32 1, %s19
    $region7: #{tpu_custom_call.1} parent=1 // loop_footer_branch
      %18 = sbr.rel target = $region3
    $region8: #{tpu_custom_call.1} parent=1 // loop_exit
      _
    %435 = vsyncpa [#allocation3], 1
    %s436 = scalar_lea.sflag [#allocation3], 1
    %437 = vsyncpa %s436, 1
    %438 = vsyncpa [#allocation6], 1
    %s439 = scalar_lea.sflag [#allocation6], 1
    %440 = vsyncpa %s439, 1
    %441 = vsyncpa [#allocation4], 1
    %s442 = scalar_lea.sflag [#allocation4], 1
    %443 = vsyncpa %s442, 1

</llo_original>
